<compile_context>
chip_gen: v6e
topology: v6e:2x2x1
jax: 0.10.0
libtpu: 0.0.40
codegen_flags: <defaults>
</compile_context>

<pallas_src>
import functools

import jax
import jax.numpy as jnp
from jax.experimental import pallas as pl
from jax.experimental.pallas import tpu as pltpu

NEG_INF = -1e9          # additive masking value (safe in f32, exp() underflows to 0)


def _default_vmem_limit():
    """Generation-dependent scoped-VMEM budget: ~75% of physical, capped at 96 MiB."""
    try:
        info = pltpu.get_tpu_info()
        cap = getattr(info, "vmem_capacity_bytes", None)
        if cap:
            return int(min(cap * 3 // 4, 96 * 1024 * 1024))
    except Exception:
        pass
    return 64 * 1024 * 1024


VMEM_LIMIT = _default_vmem_limit()


def _pick_block(dim, target, align):
    """Largest divisor of `dim` that is a multiple of `align` and <= target.

    Falls back to the full dimension only when no aligned divisor exists
    (full-dim blocks are always legal for Pallas)."""
    if dim <= target:
        return dim
    b = (target // align) * align
    while b >= align:
        if dim % b == 0:
            return b
        b -= align
    return dim


# ----------------------------------------------------------------------------
# Kernel 1: (optional LayerNorm) + GEMM + bias (+ optional activation)
#   LN'd row tile is cached in VMEM at the first column block (j == 0).
# ----------------------------------------------------------------------------
def _ln_gemm_kernel(x_ref, g_ref, beta_ref, w_ref, bias_ref, o_ref, xln_ref, *,
                    apply_ln, activation, eps):
    j = pl.program_id(1)

    @pl.when(j == 0)
    def _():
        x = x_ref[...].astype(jnp.float32)
        if apply_ln:
            mean = jnp.mean(x, axis=-1, keepdims=True)
            var = jnp.mean(jnp.square(x - mean), axis=-1, keepdims=True)
            x = (x - mean) * jax.lax.rsqrt(var + eps) * g_ref[...] + beta_ref[...]
        xln_ref[...] = x.astype(xln_ref.dtype)

    y = jnp.dot(xln_ref[...], w_ref[...], preferred_element_type=jnp.float32)
    y = y + bias_ref[...]
    if activation == "relu":
        y = jnp.maximum(y, 0.0)
    o_ref[...] = y.astype(o_ref.dtype)


def ln_gemm(x2d, w, bias, gamma=None, beta=None, activation=None, eps=1e-5,
            bm=512, bn=512, out_dtype=None, compute_dtype=jnp.bfloat16):
    n, d = x2d.shape
    dout = w.shape[1]
    out_dtype = out_dtype or x2d.dtype
    bm = _pick_block(n, bm, 8)
    bn = _pick_block(dout, bn, 128)
    apply_ln = gamma is not None
    if gamma is None:
        gamma = jnp.ones((d,), jnp.float32)
        beta = jnp.zeros((d,), jnp.float32)
    return pl.pallas_call(
        functools.partial(_ln_gemm_kernel, apply_ln=apply_ln,
                          activation=activation, eps=eps),
        grid=(n // bm, dout // bn),
        in_specs=[
            pl.BlockSpec((bm, d), lambda i, j: (i, 0)),
            pl.BlockSpec((1, d), lambda i, j: (0, 0)),
            pl.BlockSpec((1, d), lambda i, j: (0, 0)),
            pl.BlockSpec((d, bn), lambda i, j: (0, j)),
            pl.BlockSpec((1, bn), lambda i, j: (0, j)),
        ],
        out_specs=pl.BlockSpec((bm, bn), lambda i, j: (i, j)),
        out_shape=jax.ShapeDtypeStruct((n, dout), out_dtype),
        scratch_shapes=[pltpu.VMEM((bm, d), compute_dtype)],
        compiler_params=pltpu.CompilerParams(
            dimension_semantics=("parallel", "arbitrary"),
            vmem_limit_bytes=VMEM_LIMIT),
    )(x2d, gamma.reshape(1, d).astype(jnp.float32),
      beta.reshape(1, d).astype(jnp.float32), w, bias.reshape(1, dout))


# ----------------------------------------------------------------------------
# Kernel 2: tiled GEMM with K-loop, bias + residual fused; accumulate directly
#           into the resident f32 output block (no extra scratch).
# ----------------------------------------------------------------------------
def _gemm_res_kernel(x_ref, w_ref, bias_ref, res_ref, o_ref):
    k = pl.program_id(2)

    @pl.when(k == 0)
    def _():
        o_ref[...] = res_ref[...].astype(jnp.float32) + bias_ref[...]

    o_ref[...] += jnp.dot(x_ref[...], w_ref[...],
                          preferred_element_type=jnp.float32)


def gemm_residual(x2d, w, bias, residual2d, bm=512, bn=512, bk=512):
    n, kdim = x2d.shape
    dout = w.shape[1]
    bm = _pick_block(n, bm, 8)
    bn = _pick_block(dout, bn, 128)
    bk = _pick_block(kdim, bk, 128)
    return pl.pallas_call(
        _gemm_res_kernel,
        grid=(n // bm, dout // bn, kdim // bk),
        in_specs=[
            pl.BlockSpec((bm, bk), lambda i, j, k: (i, k)),
            pl.BlockSpec((bk, bn), lambda i, j, k: (k, j)),
            pl.BlockSpec((1, bn), lambda i, j, k: (0, j)),
            pl.BlockSpec((bm, bn), lambda i, j, k: (i, j)),
        ],
        out_specs=pl.BlockSpec((bm, bn), lambda i, j, k: (i, j)),
        out_shape=jax.ShapeDtypeStruct((n, dout), jnp.float32),
        compiler_params=pltpu.CompilerParams(
            dimension_semantics=("parallel", "parallel", "arbitrary"),
            vmem_limit_bytes=VMEM_LIMIT),
    )(x2d, w, bias.reshape(1, dout).astype(jnp.float32), residual2d)


# ----------------------------------------------------------------------------
# Kernel 3: fused FFN block: LN + fc1 + ReLU + fc2 + bias + residual.
#           LN tile cached in VMEM, accumulation in the resident f32 output.
# ----------------------------------------------------------------------------
def _ffn_kernel(x_ref, g_ref, beta_ref, w1_ref, b1_ref, w2_ref, b2_ref, o_ref,
                xln_ref, *, eps):
    f = pl.program_id(1)

    @pl.when(f == 0)
    def _():
        x = x_ref[...].astype(jnp.float32)
        mean = jnp.mean(x, axis=-1, keepdims=True)
        var = jnp.mean(jnp.square(x - mean), axis=-1, keepdims=True)
        xln = (x - mean) * jax.lax.rsqrt(var + eps) * g_ref[...] + beta_ref[...]
        xln_ref[...] = xln.astype(xln_ref.dtype)
        o_ref[...] = x + b2_ref[...]                # residual + fc2 bias init

    h = jnp.dot(xln_ref[...], w1_ref[...], preferred_element_type=jnp.float32)
    h = jnp.maximum(h + b1_ref[...], 0.0)
    o_ref[...] += jnp.dot(h.astype(w2_ref.dtype), w2_ref[...],
                          preferred_element_type=jnp.float32)


def ffn_block(prep, x2d, bm=512, bf=1024, eps=1e-5, compute_dtype=jnp.bfloat16):
    n, d = x2d.shape
    ffn = prep["fc1_w"].shape[1]
    bm = _pick_block(n, bm, 8)
    bf = _pick_block(ffn, bf, 128)
    return pl.pallas_call(
        functools.partial(_ffn_kernel, eps=eps),
        grid=(n // bm, ffn // bf),
        in_specs=[
            pl.BlockSpec((bm, d), lambda i, f: (i, 0)),
            pl.BlockSpec((1, d), lambda i, f: (0, 0)),
            pl.BlockSpec((1, d), lambda i, f: (0, 0)),
            pl.BlockSpec((d, bf), lambda i, f: (0, f)),
            pl.BlockSpec((1, bf), lambda i, f: (0, f)),
            pl.BlockSpec((bf, d), lambda i, f: (f, 0)),
            pl.BlockSpec((1, d), lambda i, f: (0, 0)),
        ],
        out_specs=pl.BlockSpec((bm, d), lambda i, f: (i, 0)),
        out_shape=jax.ShapeDtypeStruct((n, d), jnp.float32),
        scratch_shapes=[pltpu.VMEM((bm, d), compute_dtype)],
        compiler_params=pltpu.CompilerParams(
            dimension_semantics=("parallel", "arbitrary"),
            vmem_limit_bytes=VMEM_LIMIT),
    )(x2d,
      prep["final_ln_g"].reshape(1, d), prep["final_ln_b"].reshape(1, d),
      prep["fc1_w"], prep["fc1_b"].reshape(1, ffn),
      prep["fc2_w"], prep["fc2_b"].reshape(1, d))


# ----------------------------------------------------------------------------
# Kernel 4: per-batch multi-head attention (all heads per grid step).
#   q/k/v sliced from the packed VMEM ref; per-head ctx written into a (T, D)
#   VMEM scratch (single lane-dense final store); head-averaged weights
#   accumulated in a (T, S) VMEM scratch with exact softmax normalization.
# ----------------------------------------------------------------------------
def _attn_kernel(*refs, num_heads, head_dim, d_model, packed_qkv, has_mask,
                 has_kpm, has_head_bias, need_weights, compute_dtype):
    it = iter(refs)
    if packed_qkv:
        qkv_ref = next(it)
    else:
        q_ref = next(it)
        kv_ref = next(it)
    mask_ref = next(it) if has_mask else None
    kpm_ref = next(it) if has_kpm else None
    hb_ref = next(it) if has_head_bias else None
    ctx_ref = next(it)
    w_ref = next(it) if need_weights else None
    ctx_sc = next(it)
    w_sc = next(it) if need_weights else None

    d = d_model
    hd = head_dim

    if packed_qkv:
        qkv = qkv_ref[0]                           # (T, 3D) bf16, q-scale folded into W_q
        q2 = qkv[:, :d].astype(compute_dtype)
        k2 = qkv[:, d:2 * d].astype(compute_dtype)
        v2 = qkv[:, 2 * d:].astype(compute_dtype)
    else:
        q2 = q_ref[0].astype(compute_dtype)        # (T, D)
        kv = kv_ref[0]                             # (S, 2D)
        k2 = kv[:, :d].astype(compute_dtype)
        v2 = kv[:, d:].astype(compute_dtype)

    base = None                                    # shared additive bias (T, S) / (1, S)
    if has_mask:
        base = mask_ref[...]
    if has_kpm:
        kpm = kpm_ref[0]                           # (1, S), broadcasts over T
        base = kpm if base is None else base + kpm

    for h in range(num_heads):
        sl = slice(h * hd, (h + 1) * hd)
        logits = jax.lax.dot_general(
            q2[:, sl], k2[:, sl],
            (((1,), (1,)), ((), ())),              # contract head_dim, no K transpose
            preferred_element_type=jnp.float32)    # (T, S) in f32
        if base is not None:
            logits = logits + base
        if has_head_bias:
            logits = logits + hb_ref[0, h]
        m = jnp.max(logits, axis=-1, keepdims=True)
        e = jnp.exp(logits - m)
        denom = jnp.sum(e, axis=-1, keepdims=True)
        if need_weights:
            p = e / denom                          # exact on the returned-weights path
            if h == 0:
                w_sc[...] = p
            else:
                w_sc[...] += p
        else:
            p = e * pl.reciprocal(denom, approx=True)
        part = jnp.dot(p.astype(compute_dtype), v2[:, sl],
                       preferred_element_type=jnp.float32)
        ctx_sc[:, sl] = part.astype(ctx_sc.dtype)  # bound live range to one head

    ctx_ref[0] = ctx_sc[...].astype(ctx_ref.dtype)  # single lane-dense store
    if need_weights:
        w_ref[0] = w_sc[...] * (1.0 / num_heads)


def attention_core(num_heads, d_model, qkv=None, q=None, kv=None,
                   attn_mask=None, kpm_bias=None, head_bias=None,
                   need_weights=False, compute_dtype=jnp.bfloat16):
    packed = qkv is not None
    if packed:
        b, t, three_d = qkv.shape
        s = t
        in_arrays = [qkv]
        in_specs = [pl.BlockSpec((1, t, three_d), lambda i: (i, 0, 0))]
    else:
        b, t, _ = q.shape
        s = kv.shape[1]
        in_arrays = [q, kv]
        in_specs = [pl.BlockSpec((1, t, d_model), lambda i: (i, 0, 0)),
                    pl.BlockSpec((1, s, 2 * d_model), lambda i: (i, 0, 0))]
    hd = d_model // num_heads

    if attn_mask is not None:                      # (T, S), shared across batch
        in_arrays.append(attn_mask.astype(jnp.float32))
        in_specs.append(pl.BlockSpec((t, s), lambda i: (0, 0)))
    if kpm_bias is not None:                       # (B, 1, S), additive f32
        in_arrays.append(kpm_bias)
        in_specs.append(pl.BlockSpec((1, 1, s), lambda i: (i, 0, 0)))
    if head_bias is not None:                      # (B, H, T, S)
        in_arrays.append(head_bias.astype(jnp.float32))
        in_specs.append(pl.BlockSpec((1, num_heads, t, s), lambda i: (i, 0, 0, 0)))

    out_shapes = [jax.ShapeDtypeStruct((b, t, d_model), compute_dtype)]
    out_specs = [pl.BlockSpec((1, t, d_model), lambda i: (i, 0, 0))]
    if need_weights:
        out_shapes.append(jax.ShapeDtypeStruct((b, t, s), jnp.float32))
        out_specs.append(pl.BlockSpec((1, t, s), lambda i: (i, 0, 0)))

    scratch_shapes = [pltpu.VMEM((t, d_model), compute_dtype)]
    if need_weights:
        scratch_shapes.append(pltpu.VMEM((t, s), jnp.float32))

    outs = pl.pallas_call(
        functools.partial(_attn_kernel, num_heads=num_heads, head_dim=hd,
                          d_model=d_model, packed_qkv=packed,
                          has_mask=attn_mask is not None,
                          has_kpm=kpm_bias is not None,
                          has_head_bias=head_bias is not None,
                          need_weights=need_weights,
                          compute_dtype=compute_dtype),
        grid=(b,),
        in_specs=in_specs,
        out_specs=out_specs,
        out_shape=out_shapes,
        scratch_shapes=scratch_shapes,
        compiler_params=pltpu.CompilerParams(
            dimension_semantics=("parallel",),
            vmem_limit_bytes=VMEM_LIMIT),
    )(*in_arrays)
    if need_weights:
        return outs[0], outs[1]
    return outs[0], None


# ----------------------------------------------------------------------------
# Parameter pre-fusion: concat / scale / cast weights to bf16 once.
# ----------------------------------------------------------------------------
def prepare_layer_params(params, num_heads, compute_dtype=jnp.bfloat16):
    d = params["self_attn"]["q_w"].shape[0]
    hd = d // num_heads
    scale = hd ** -0.5
    sa, ea = params["self_attn"], params["enc_attn"]
    f32 = jnp.float32
    return {
        "self_wqkv": jnp.concatenate([sa["q_w"] * scale, sa["k_w"], sa["v_w"]],
                                     axis=1).astype(compute_dtype),
        "self_bqkv": jnp.concatenate([sa["q_b"] * scale, sa["k_b"], sa["v_b"]]).astype(f32),
        "self_ow": sa["o_w"].astype(compute_dtype),
        "self_ob": sa["o_b"].astype(f32),
        "enc_wq": (ea["q_w"] * scale).astype(compute_dtype),
        "enc_bq": (ea["q_b"] * scale).astype(f32),
        "enc_wkv": jnp.concatenate([ea["k_w"], ea["v_w"]], axis=1).astype(compute_dtype),
        "enc_bkv": jnp.concatenate([ea["k_b"], ea["v_b"]]).astype(f32),
        "enc_ow": ea["o_w"].astype(compute_dtype),
        "enc_ob": ea["o_b"].astype(f32),
        "fc1_w": params["fc1_w"].astype(compute_dtype),
        "fc1_b": params["fc1_b"].astype(f32),
        "fc2_w": params["fc2_w"].astype(compute_dtype),
        "fc2_b": params["fc2_b"].astype(f32),
        "self_ln_g": params["self_ln_g"].astype(f32),
        "self_ln_b": params["self_ln_b"].astype(f32),
        "enc_ln_g": params["enc_ln_g"].astype(f32),
        "enc_ln_b": params["enc_ln_b"].astype(f32),
        "final_ln_g": params["final_ln_g"].astype(f32),
        "final_ln_b": params["final_ln_b"].astype(f32),
        "embed_dim": d,
        "num_heads": num_heads,
    }


# ----------------------------------------------------------------------------
# Attention blocks (wrappers, working in (B*T, D) row order)
# ----------------------------------------------------------------------------
def self_attention_block(prep, x2d, batch, seq, num_heads,
                         attn_mask=None, attn_bias=None,
                         compute_dtype=jnp.bfloat16):
    n, d = x2d.shape
    # fused LN + QKV projection (single (D, 3D) bf16 GEMM), output kept in bf16
    qkv = ln_gemm(x2d, prep["self_wqkv"], prep["self_bqkv"],
                  gamma=prep["self_ln_g"], beta=prep["self_ln_b"],
                  out_dtype=compute_dtype, compute_dtype=compute_dtype)
    qkv = qkv.reshape(batch, seq, 3 * d)
    head_bias = None if attn_bias is None else attn_bias.reshape(batch, num_heads, seq, seq)
    ctx, _ = attention_core(num_heads, d, qkv=qkv, attn_mask=attn_mask,
                            head_bias=head_bias, need_weights=False,
                            compute_dtype=compute_dtype)
    # output projection with fused residual add (residual = pre-LN input)
    return gemm_residual(ctx.reshape(n, d), prep["self_ow"], prep["self_ob"], x2d)


def cross_attention_block(prep, x2d, enc2d, batch, tgt, src, num_heads,
                          key_padding_mask=None, attn_bias=None,
                          compute_dtype=jnp.bfloat16):
    n, d = x2d.shape
    q2d = ln_gemm(x2d, prep["enc_wq"], prep["enc_bq"],
                  gamma=prep["enc_ln_g"], beta=prep["enc_ln_b"],
                  out_dtype=compute_dtype, compute_dtype=compute_dtype)
    kv2d = ln_gemm(enc2d, prep["enc_wkv"], prep["enc_bkv"],
                   out_dtype=compute_dtype, compute_dtype=compute_dtype)  # no LN on encoder states
    q = q2d.reshape(batch, tgt, d)
    kv = kv2d.reshape(batch, src, 2 * d)

    kpm_bias = None
    if key_padding_mask is not None:
        kpm_bias = jnp.where(key_padding_mask, NEG_INF, 0.0).astype(jnp.float32)
        kpm_bias = kpm_bias.reshape(batch, 1, src)
    head_bias = None if attn_bias is None else attn_bias.reshape(batch, num_heads, tgt, src)

    ctx, attn_w = attention_core(num_heads, d, q=q, kv=kv, kpm_bias=kpm_bias,
                                 head_bias=head_bias, need_weights=True,
                                 compute_dtype=compute_dtype)
    out = gemm_residual(ctx.reshape(n, d), prep["enc_ow"], prep["enc_ob"], x2d)
    return out, attn_w


# ----------------------------------------------------------------------------
# Full decoder-layer forward
# ----------------------------------------------------------------------------
def transformer_decoder_layer_forward(prep, x, encoder_out=None,
                                      encoder_padding_mask=None,
                                      self_attn_mask=None,
                                      self_attn_bias=None,
                                      cross_attn_bias=None,
                                      normalize_before=True,
                                      compute_dtype=jnp.bfloat16):
    if not normalize_before:
        # TODO(synk): post-norm (normalize_before=False) path is not wired into
        # the fused LN+GEMM kernels.
        raise NotImplementedError("only normalize_before=True is implemented")

    num_heads = prep["num_heads"]
    t, b, d = x.shape
    # Work internally in (B, T) row order so the per-batch attention kernel and
    # all row-wise GEMMs need no per-tensor transposes.
    xb = x.astype(jnp.float32).transpose(1, 0, 2).reshape(b * t, d)

    xb = self_attention_block(prep, xb, b, t, num_heads,
                              attn_mask=self_attn_mask,
                              attn_bias=self_attn_bias,
                              compute_dtype=compute_dtype)

    attn = None
    if encoder_out is not None:
        s = encoder_out.shape[0]
        encb = encoder_out.astype(jnp.float32).transpose(1, 0, 2).reshape(b * s, d)
        xb, attn = cross_attention_block(prep, xb, encb, b, t, s, num_heads,
                                         key_padding_mask=encoder_padding_mask,
                                         attn_bias=cross_attn_bias,
                                         compute_dtype=compute_dtype)

    xb = ffn_block(prep, xb, compute_dtype=compute_dtype)

    out = xb.reshape(b, t, d).transpose(1, 0, 2).astype(x.dtype)
    return out, attn, None


# ----------------------------------------------------------------------------
# Deterministic parameter init (shapes from the module's __init__)
# ----------------------------------------------------------------------------
def init_params(key, d, ffn, dtype=jnp.float32):
    def lin(k, din, dout):
        return 0.02 * jax.random.normal(k, (din, dout), dtype), jnp.zeros((dout,), dtype)

    ks = list(jax.random.split(key, 10))
    sq_w, sq_b = lin(ks[0], d, d)
    sk_w, sk_b = lin(ks[1], d, d)
    sv_w, sv_b = lin(ks[2], d, d)
    so_w, so_b = lin(ks[3], d, d)
    cq_w, cq_b = lin(ks[4], d, d)
    ck_w, ck_b = lin(ks[5], d, d)
    cv_w, cv_b = lin(ks[6], d, d)
    co_w, co_b = lin(ks[7], d, d)
    f1_w, f1_b = lin(ks[8], d, ffn)
    f2_w, f2_b = lin(ks[9], ffn, d)
    ones, zeros = jnp.ones((d,), dtype), jnp.zeros((d,), dtype)
    return {
        "self_attn": {"q_w": sq_w, "q_b": sq_b, "k_w": sk_w, "k_b": sk_b,
                      "v_w": sv_w, "v_b": sv_b, "o_w": so_w, "o_b": so_b},
        "enc_attn": {"q_w": cq_w, "q_b": cq_b, "k_w": ck_w, "k_b": ck_b,
                     "v_w": cv_w, "v_b": cv_b, "o_w": co_w, "o_b": co_b},
        "fc1_w": f1_w, "fc1_b": f1_b, "fc2_w": f2_w, "fc2_b": f2_b,
        "self_ln_g": ones, "self_ln_b": zeros,
        "enc_ln_g": ones, "enc_ln_b": zeros,
        "final_ln_g": ones, "final_ln_b": zeros,
    }


# ----------------------------------------------------------------------------
# Pure-JAX f32 reference (correctness check of the Pallas path)
# ----------------------------------------------------------------------------
def _ref_forward(params, x, enc, enc_pad, self_mask, num_heads):
    def ln(v, g, b):
        m = v.mean(-1, keepdims=True)
        var = ((v - m) ** 2).mean(-1, keepdims=True)
        return (v - m) / jnp.sqrt(var + 1e-5) * g + b

    def mha(p, q_in, kv, h, mask=None, kpm=None):
        t, b, d = q_in.shape
        s = kv.shape[0]
        hd = d // h
        q = (q_in.reshape(t * b, d) @ p["q_w"] + p["q_b"]).reshape(t, b * h, hd).transpose(1, 0, 2)
        k = (kv.reshape(s * b, d) @ p["k_w"] + p["k_b"]).reshape(s, b * h, hd).transpose(1, 0, 2)
        v = (kv.reshape(s * b, d) @ p["v_w"] + p["v_b"]).reshape(s, b * h, hd).transpose(1, 0, 2)
        logits = jnp.einsum("btd,bsd->bts", q * hd ** -0.5, k)
        if mask is not None:
            logits = logits + mask[None]
        if kpm is not None:
            logits = logits + jnp.repeat(jnp.where(kpm, NEG_INF, 0.0), h, axis=0)[:, None, :]
        pr = jax.nn.softmax(logits, axis=-1)
        o = jnp.einsum("bts,bsd->btd", pr, v).transpose(1, 0, 2).reshape(t * b, d)
        attn_avg = pr.reshape(b, h, t, s).mean(axis=1)
        return (o @ p["o_w"] + p["o_b"]).reshape(t, b, d), attn_avg

    r = x
    h1 = ln(x, params["self_ln_g"], params["self_ln_b"])
    sa, _ = mha(params["self_attn"], h1, h1, num_heads, mask=self_mask)
    x = r + sa
    r = x
    h2 = ln(x, params["enc_ln_g"], params["enc_ln_b"])
    ca, attn = mha(params["enc_attn"], h2, enc, num_heads, kpm=enc_pad)
    x = r + ca
    r = x
    h3 = ln(x, params["final_ln_g"], params["final_ln_b"])
    h3 = jnp.maximum(h3.reshape(-1, h3.shape[-1]) @ params["fc1_w"] + params["fc1_b"], 0.0)
    h3 = (h3 @ params["fc2_w"] + params["fc2_b"]).reshape(x.shape)
    return r + h3, attn


if __name__ == "__main__":
    T, B, D, H, FFN, S = 8, 2, 32, 4, 64, 8

    key = jax.random.PRNGKey(0)
    kx, kenc, kp = jax.random.split(key, 3)
    x = jax.random.normal(kx, (T, B, D), jnp.float32)
    encoder_out = jax.random.normal(kenc, (S, B, D), jnp.float32)

    # causal self-attention mask (additive, (T, T)); pad last 2 encoder tokens of batch 1
    self_attn_mask = jnp.where(jnp.triu(jnp.ones((T, T), bool), k=1),
                               NEG_INF, 0.0).astype(jnp.float32)
    encoder_padding_mask = jnp.zeros((B, S), bool).at[1, S - 2:].set(True)

    params = init_params(kp, D, FFN)
    prep = prepare_layer_params(params, H)   # pre-fused / pre-scaled bf16 weights, once

    out, attn, _ = transformer_decoder_layer_forward(
        prep, x, encoder_out,
        encoder_padding_mask=encoder_padding_mask,
        self_attn_mask=self_attn_mask,
        normalize_before=True)
    out = jax.block_until_ready(out)
    attn = jax.block_until_ready(attn)

    ref_out, ref_attn = _ref_forward(params, x, encoder_out,
                                     encoder_padding_mask, self_attn_mask, H)
    assert out.shape == (T, B, D) and attn.shape == (B, T, S)
    assert jnp.allclose(out, ref_out, atol=2e-2, rtol=2e-2), (
        "output mismatch: max abs err %e" % float(jnp.max(jnp.abs(out - ref_out))))
    assert jnp.allclose(attn, ref_attn, atol=2e-2, rtol=2e-2), (
        "attn mismatch: max abs err %e" % float(jnp.max(jnp.abs(attn - ref_attn))))

    print("KERNEL_OK")
</pallas_src>

<mosaic_0001>
module attributes {stable_mosaic.version = 11 : i64} {
  func.func @_ln_gemm_kernel(%arg0: i32, %arg1: i32, %arg2: memref<16x32xf32, #tpu.memory_space<vmem>>, %arg3: memref<1x32xf32, #tpu.memory_space<vmem>>, %arg4: memref<1x32xf32, #tpu.memory_space<vmem>>, %arg5: memref<32x96xbf16, #tpu.memory_space<vmem>>, %arg6: memref<1x96xf32, #tpu.memory_space<vmem>>, %arg7: memref<16x96xbf16, #tpu.memory_space<vmem>>, %arg8: memref<16x32xbf16, #tpu.memory_space<vmem>>) attributes {dimension_semantics = [#tpu.dimension_semantics<parallel>, #tpu.dimension_semantics<arbitrary>], iteration_bounds = array<i64: 1, 1>, scalar_prefetch = 0 : i64, scratch_operands = 1 : i64, tpu.core_type = #tpu.core_type<tc>, window_params = [{transform_indices = @transform_0, window_bounds = array<i64: 16, 32>}, {pipeline_mode = #tpu.pipeline_mode<synchronous>, transform_indices = @transform_1, window_bounds = array<i64: 1, 32>}, {pipeline_mode = #tpu.pipeline_mode<synchronous>, transform_indices = @transform_2, window_bounds = array<i64: 1, 32>}, {transform_indices = @transform_3, window_bounds = array<i64: 32, 96>}, {transform_indices = @transform_4, window_bounds = array<i64: 1, 96>}, {transform_indices = @transform_5, window_bounds = array<i64: 16, 96>}]} {
    %c0_i32 = arith.constant 0 : i32
    %0 = arith.cmpi eq, %arg1, %c0_i32 : i32
    %1 = arith.extui %0 : i1 to i32
    %c0_i32_0 = arith.constant 0 : i32
    %2 = arith.cmpi ne, %1, %c0_i32_0 : i32
    scf.if %2 {
      %c0_8 = arith.constant 0 : index
      %c0_9 = arith.constant 0 : index
      %11 = vector.load %arg2[%c0_8, %c0_9] : memref<16x32xf32, #tpu.memory_space<vmem>>, vector<16x32xf32>
      %cst_10 = arith.constant dense<0.000000e+00> : vector<16xf32>
      %12 = vector.multi_reduction <add>, %11, %cst_10 [1] : vector<16x32xf32> to vector<16xf32>
      %13 = vector.shape_cast %12 : vector<16xf32> to vector<16x1xf32>
      %cst_11 = arith.constant 3.200000e+01 : f32
      %14 = vector.broadcast %cst_11 : f32 to vector<16x1xf32>
      %15 = arith.divf %13, %14 : vector<16x1xf32>
      %16 = vector.broadcast %15 : vector<16x1xf32> to vector<16x32xf32>
      %17 = arith.subf %11, %16 : vector<16x32xf32>
      %18 = arith.mulf %17, %17 : vector<16x32xf32>
      %cst_12 = arith.constant dense<0.000000e+00> : vector<16xf32>
      %19 = vector.multi_reduction <add>, %18, %cst_12 [1] : vector<16x32xf32> to vector<16xf32>
      %20 = vector.shape_cast %19 : vector<16xf32> to vector<16x1xf32>
      %cst_13 = arith.constant 3.200000e+01 : f32
      %21 = vector.broadcast %cst_13 : f32 to vector<16x1xf32>
      %22 = arith.divf %20, %21 : vector<16x1xf32>
      %23 = vector.broadcast %15 : vector<16x1xf32> to vector<16x32xf32>
      %24 = arith.subf %11, %23 : vector<16x32xf32>
      %cst_14 = arith.constant 9.99999974E-6 : f32
      %25 = vector.broadcast %cst_14 : f32 to vector<16x1xf32>
      %26 = arith.addf %22, %25 : vector<16x1xf32>
      %27 = math.rsqrt %26 : vector<16x1xf32>
      %28 = vector.broadcast %27 : vector<16x1xf32> to vector<16x32xf32>
      %29 = arith.mulf %24, %28 : vector<16x32xf32>
      %c0_15 = arith.constant 0 : index
      %c0_16 = arith.constant 0 : index
      %30 = vector.load %arg3[%c0_15, %c0_16] : memref<1x32xf32, #tpu.memory_space<vmem>>, vector<1x32xf32>
      %31 = vector.broadcast %30 : vector<1x32xf32> to vector<16x32xf32>
      %32 = arith.mulf %29, %31 : vector<16x32xf32>
      %c0_17 = arith.constant 0 : index
      %c0_18 = arith.constant 0 : index
      %33 = vector.load %arg4[%c0_17, %c0_18] : memref<1x32xf32, #tpu.memory_space<vmem>>, vector<1x32xf32>
      %34 = vector.broadcast %33 : vector<1x32xf32> to vector<16x32xf32>
      %35 = arith.addf %32, %34 : vector<16x32xf32>
      %36 = arith.truncf %35 : vector<16x32xf32> to vector<16x32xbf16>
      %c0_19 = arith.constant 0 : index
      %c0_20 = arith.constant 0 : index
      %37 = vector.load %arg8[%c0_19, %c0_20] : memref<16x32xbf16, #tpu.memory_space<vmem>>, vector<16x32xbf16>
      tpu.vector_store %arg8[%c0_19, %c0_20], %36 {strides = array<i32>} : memref<16x32xbf16, #tpu.memory_space<vmem>>, vector<16x32xbf16>,
    } else {
    }
    %c0 = arith.constant 0 : index
    %c0_1 = arith.constant 0 : index
    %3 = vector.load %arg8[%c0, %c0_1] : memref<16x32xbf16, #tpu.memory_space<vmem>>, vector<16x32xbf16>
    %c0_2 = arith.constant 0 : index
    %c0_3 = arith.constant 0 : index
    %4 = vector.load %arg5[%c0_2, %c0_3] : memref<32x96xbf16, #tpu.memory_space<vmem>>, vector<32x96xbf16>
    %cst = arith.constant dense<0.000000e+00> : vector<16x96xf32>
    %5 = tpu.matmul %3, %4, %cst {dimension_numbers = #tpu.dot_dimension_numbers<[1], [0], [0], [1], [0, 0, 1, 1], [], []>} : vector<16x32xbf16>, vector<32x96xbf16>, vector<16x96xf32> -> vector<16x96xf32>
    %c0_4 = arith.constant 0 : index
    %c0_5 = arith.constant 0 : index
    %6 = vector.load %arg6[%c0_4, %c0_5] : memref<1x96xf32, #tpu.memory_space<vmem>>, vector<1x96xf32>
    %7 = vector.broadcast %6 : vector<1x96xf32> to vector<16x96xf32>
    %8 = arith.addf %5, %7 : vector<16x96xf32>
    %9 = arith.truncf %8 : vector<16x96xf32> to vector<16x96xbf16>
    %c0_6 = arith.constant 0 : index
    %c0_7 = arith.constant 0 : index
    %10 = vector.load %arg7[%c0_6, %c0_7] : memref<16x96xbf16, #tpu.memory_space<vmem>>, vector<16x96xbf16>
    tpu.vector_store %arg7[%c0_6, %c0_7], %9 {strides = array<i32>} : memref<16x96xbf16, #tpu.memory_space<vmem>>, vector<16x96xbf16>,
    return
  }
  func.func @transform_0(%arg0: i32, %arg1: i32) -> (i32, i32) {
    %c0_i32 = arith.constant 0 : i32
    %c0_i32_0 = arith.constant 0 : i32
    return %arg0, %c0_i32 : i32, i32
  }
  func.func @transform_1(%arg0: i32, %arg1: i32) -> (i32, i32) {
    %c0_i32 = arith.constant 0 : i32
    %c0_i32_0 = arith.constant 0 : i32
    %c0_i32_1 = arith.constant 0 : i32
    return %c0_i32, %c0_i32_0 : i32, i32
  }
  func.func @transform_2(%arg0: i32, %arg1: i32) -> (i32, i32) {
    %c0_i32 = arith.constant 0 : i32
    %c0_i32_0 = arith.constant 0 : i32
    %c0_i32_1 = arith.constant 0 : i32
    return %c0_i32, %c0_i32_0 : i32, i32
  }
  func.func @transform_3(%arg0: i32, %arg1: i32) -> (i32, i32) {
    %c0_i32 = arith.constant 0 : i32
    %c0_i32_0 = arith.constant 0 : i32
    return %c0_i32, %arg1 : i32, i32
  }
  func.func @transform_4(%arg0: i32, %arg1: i32) -> (i32, i32) {
    %c0_i32 = arith.constant 0 : i32
    %c0_i32_0 = arith.constant 0 : i32
    return %c0_i32, %arg1 : i32, i32
  }
  func.func @transform_5(%arg0: i32, %arg1: i32) -> (i32, i32) {
    %c0_i32 = arith.constant 0 : i32
    return %arg0, %arg1 : i32, i32
  }
}

</mosaic_0001>

<llo_original>
// kernel: tpu_custom_call.1
$region0: #{tpu_custom_call.1}
  #allocation0 [shape = 'u32[]', space=smem, size = 0x4, offset = 0x4, fixed_abs, tag = 'smem constant byte address 0x4 - core index']
  #allocation1 [shape = 'u32[144,128]{1,0:T(1,128)}', space=vmem, size = 0x12000, scoped, tag = 'internal scratch']
  #allocation2 [shape = 'bf16[16,32]{1,0:T(8,128)(2,1)}', space=vmem, size = 0x1000, scoped, tag = 'scratch operand']
  %s0 = inlined_call_operand.hbm [shape: f32[16,32], index: 0, kind: input, shape index: {}]
  %s1 = inlined_call_operand.vmem [shape: f32[1,32], index: 1, kind: input, shape index: {}]
  %s2 = inlined_call_operand.vmem [shape: f32[1,32], index: 2, kind: input, shape index: {}]
  %s3 = inlined_call_operand.hbm [shape: bf16[32,96], index: 3, kind: input, shape index: {}]
  %s4 = inlined_call_operand.vmem [shape: f32[1,96], index: 4, kind: input, shape index: {}]
  %s5 = inlined_call_operand.hbm [shape: bf16[16,96], index: 5, kind: output, shape index: {}]
  %s6 = sld [smem:[#allocation0]]
  $region42: #{tpu_custom_call.1} parent=0
    _
  %s8 = ssub.s32 1, %s6
  %s9 = scalar_select 0, %s8, %s6
  $region1: #{tpu_custom_call.1} parent=0
    #allocation3 [shape = 'u8[8192]{0}', space=vmem, size = 0x2000, scoped, tag = 'input window, operand 0, single buffered']
    #allocation4 [shape = 's32[1]{0}', space=sflag, size = 0x4, scoped, tag = 'scoped memory for tpu_custom_call.1']
    #allocation5 [shape = 's32[1]{0}', space=sflag, size = 0x4, scoped, tag = 'scoped memory for tpu_custom_call.1']
    #allocation6 [shape = 'u8[8192]{0}', space=vmem, size = 0x2000, scoped, tag = 'input window, operand 3, single buffered']
    #allocation7 [shape = 's32[1]{0}', space=sflag, size = 0x4, scoped, tag = 'scoped memory for tpu_custom_call.1']
    #allocation8 [shape = 'u8[4096]{0}', space=vmem, size = 0x1000, scoped, tag = 'output window, operand 0, single buffered']
    %10 = vsyncpa [#allocation4], 0
    %11 = vsyncpa [#allocation7], 0
    %12 = vsyncpa [#allocation5], 0
    // Predicated region
    $region2: #{tpu_custom_call.1} parent=1 // pred_check
      _
    $region3: #{tpu_custom_call.1} parent=1 // pred_check_branch
      %14 = sbr.rel (0) target = $region5
    $region4: #{tpu_custom_call.1} parent=1 // pred_region
      %s16 = ssub.s32 256, 256
      %17 = vsyncadd [#allocation4], %s16
      %s18 = sshll.u32 [#allocation3], 4
      %s19 = int_to_ptr.vmem [resolvable:$true] %s18
      %24 = dma.hbm_to_vmem [thread:$0]  %s0, 256, %s19, [#allocation4], 128, 128, 8
    $region5: #{tpu_custom_call.1} parent=1 // pred_fallthru
      _
    // Predicated region
    $region6: #{tpu_custom_call.1} parent=1 // pred_check
      _
    $region7: #{tpu_custom_call.1} parent=1 // pred_check_branch
      %26 = sbr.rel (0) target = $region9
    $region8: #{tpu_custom_call.1} parent=1 // pred_region
      _
    $region9: #{tpu_custom_call.1} parent=1 // pred_fallthru
      _
    // Predicated region
    $region10: #{tpu_custom_call.1} parent=1 // pred_check
      _
    $region11: #{tpu_custom_call.1} parent=1 // pred_check_branch
      %28 = sbr.rel (0) target = $region13
    $region12: #{tpu_custom_call.1} parent=1 // pred_region
      _
    $region13: #{tpu_custom_call.1} parent=1 // pred_fallthru
      _
    // Predicated region
    $region14: #{tpu_custom_call.1} parent=1 // pred_check
      _
    $region15: #{tpu_custom_call.1} parent=1 // pred_check_branch
      %30 = sbr.rel (0) target = $region17
    $region16: #{tpu_custom_call.1} parent=1 // pred_region
      %s32 = ssub.s32 256, 256
      %33 = vsyncadd [#allocation7], %s32
      %s34 = sshll.u32 [#allocation6], 4
      %s35 = int_to_ptr.vmem [resolvable:$true] %s34
      %40 = dma.hbm_to_vmem [thread:$0]  %s3, 256, %s35, [#allocation7], 64, 64, 4
    $region17: #{tpu_custom_call.1} parent=1 // pred_fallthru
      _
    // Predicated region
    $region18: #{tpu_custom_call.1} parent=1 // pred_check
      _
    $region19: #{tpu_custom_call.1} parent=1 // pred_check_branch
      %42 = sbr.rel (0) target = $region21
    $region20: #{tpu_custom_call.1} parent=1 // pred_region
      _
    $region21: #{tpu_custom_call.1} parent=1 // pred_fallthru
      _
    // Predicated region
    $region22: #{tpu_custom_call.1} parent=1 // pred_check
      _
    $region23: #{tpu_custom_call.1} parent=1 // pred_check_branch
      %44 = sbr.rel (0) target = $region25
    $region24: #{tpu_custom_call.1} parent=1 // pred_region
      %45 = dma.done [#allocation4], 256
    $region25: #{tpu_custom_call.1} parent=1 // pred_fallthru
      _
    // Predicated region
    $region26: #{tpu_custom_call.1} parent=1 // pred_check
      _
    $region27: #{tpu_custom_call.1} parent=1 // pred_check_branch
      %47 = sbr.rel (0) target = $region29
    $region28: #{tpu_custom_call.1} parent=1 // pred_region
      %48 = dma.done [#allocation7], 256
    $region29: #{tpu_custom_call.1} parent=1 // pred_fallthru
      _
    %p50 = scmp.eq.s32.totalorder 0, 0
    // Predicated region
    $region30: #{tpu_custom_call.1} parent=1 // pred_check
      %p51 = pneg %p50
    $region31: #{tpu_custom_call.1} parent=1 // pred_check_branch
      %53 = sbr.rel (%p51) target = $region33
    $region32: #{tpu_custom_call.1} parent=1 // pred_region
      %v54 = vld [vmem:[#allocation3] sm:$0xff]
      %v55 = vld [vmem:[#allocation3 + $0x8] sm:$0xff]
      %vm56 = vcmask 261120
      %v57 = vsel %vm56, %v54, 0.0
      %58 = vadd.xlane.f32.xlu0 %v57
      %v59 = vpop.xlane.xlu0 %58
      %v60 = vsel %vm56, %v55, 0.0
      %61 = vadd.xlane.f32.xlu0 %v60
      %v62 = vpop.xlane.xlu0 %61
      %v63 = vrcp.pop 32.0
      %v64 = vmul.f32 %v59, %v63
      %v65 = vmul.f32 %v62, %v63
      %v66 = vsub.f32 %v54, %v64
      %v67 = vsub.f32 %v55, %v65
      %v68 = vmul.f32 %v66, %v66
      %v69 = vmul.f32 %v67, %v67
      %v70 = vsel %vm56, %v68, 0.0
      %71 = vadd.xlane.f32.xlu0 %v70
      %v72 = vpop.xlane.xlu0 %71
      %v73 = vsel %vm56, %v69, 0.0
      %74 = vadd.xlane.f32.xlu0 %v73
      %v75 = vpop.xlane.xlu0 %74
      %v76 = vmul.f32 %v72, %v63
      %v77 = vmul.f32 %v75, %v63
      %v78 = vadd.f32 %v76, 1e-05
      %v79 = vadd.f32 %v77, 1e-05
      %v80 = vrsqrt.pop %v78
      %v81 = vrsqrt.pop %v79
      %v82 = vmul.f32 %v66, %v80
      %v83 = vmul.f32 %v67, %v81
      %v84 = vld [vmem:[%s1] sm:$0x1]
      %v86 = vlaneseq
      %v87 = vshrl.u32 %v86, 7
      %v88 = vsub.s32 0, %v87
      %v89 = vrot.slane %v84, %v88
      %v91 = vmul.f32 %v82, %v89
      %v92 = vmul.f32 %v83, %v89
      %v93 = vld [vmem:[%s2] sm:$0x1]
      %v95 = vlaneseq
      %v96 = vshrl.u32 %v95, 7
      %v97 = vsub.s32 0, %v96
      %v98 = vrot.slane %v93, %v97
      %v100 = vadd.f32 %v91, %v98
      %v101 = vadd.f32 %v92, %v98
      %v102 = vpack.c.bf16 %v101, %v100
      %v104 = vunpack.c.l.b16 %v102
      %v105 = vunpack.c.h.b16 %v102
      %v106 = vpack.c.b16 %v104, %v104
      %v107 = vpack.c.b16 %v105, %v105
      %vm110 = vcmask 257024
      %111 = vst.msk [vmem:[#allocation2] sm:$0xf] %vm110, %v106
      %112 = vst.msk [vmem:[#allocation2 + $0x4] sm:$0xf] %vm110, %v107
    $region33: #{tpu_custom_call.1} parent=1 // pred_fallthru
      _
    %v113 = vld [vmem:[#allocation2] sm:$0xf]
    %v114 = vld [vmem:[#allocation2 + $0x4] sm:$0xf]
    %v115 = vld [vmem:[#allocation6] sm:$0xf]
    %v116 = vld [vmem:[#allocation6 + $0x4] sm:$0xf]
    %v117 = vld [vmem:[#allocation6 + $0x8] sm:$0xf]
    %v118 = vld [vmem:[#allocation6 + $0xc] sm:$0xf]
    %v119 = vld [vmem:[%s4] sm:$0x1]
    %v121 = vlaneseq
    %v122 = vshrl.u32 %v121, 7
    %v123 = vsub.s32 0, %v122
    %v124 = vrot.slane %v119, %v123
    %v128 = vunpack.c.l.b16 %v113
    %v129 = vunpack.c.l.b16 %v114
    %v130 = vpack.c.b16 %v129, %v128
    %v135 = vunpack.c.l.b16 %v115
    %v136 = vunpack.c.l.b16 %v116
    %v137 = vunpack.c.l.b16 %v117
    %v138 = vunpack.c.l.b16 %v118
    %v139 = vpack.c.b16 %v136, %v135
    %v140 = vpack.c.b16 %v138, %v137
    %vm143 = vcmask 261120
    %v145 = vsel %vm143, %v130, 0
    %147 = vmatprep.subr.bf16.mxu0 0
    %148 = vmatpush1.bf16.msra.mxu0 0
    %149 = vmatprep.subr.bf16.mxu0 0
    %150 = vmatpush1.bf16.msra.mxu0 0
    %151 = vmatprep.subr.bf16.mxu0 0
    %152 = vmatpush1.bf16.msra.mxu0 0
    %153 = vmatprep.subr.bf16.mxu0 0
    %154 = vmatpush1.bf16.msra.mxu0 0
    %155 = vmatprep.subr.bf16.mxu0 0
    %156 = vmatpush1.bf16.msra.mxu0 0
    %157 = vmatprep.subr.bf16.mxu0 0
    %158 = vmatpush1.bf16.msra.mxu0 0
    %159 = vmatprep.subr.bf16.mxu0 0
    %160 = vmatpush1.bf16.msra.mxu0 %v140
    %161 = vmatprep.subr.bf16.mxu0 0
    %162 = vmatpush1.bf16.msra.mxu0 %v139
    %163 = vmatprep.subr.bf16.mxu0 0
    %164 = vmatpush2.bf16.msra.mxu0 0
    %165 = vmatprep.subr.bf16.mxu0 0
    %166 = vmatpush2.bf16.msra.mxu0 0
    %167 = vmatprep.subr.bf16.mxu0 0
    %168 = vmatpush2.bf16.msra.mxu0 0
    %169 = vmatprep.subr.bf16.mxu0 0
    %170 = vmatpush2.bf16.msra.mxu0 0
    %171 = vmatprep.subr.bf16.mxu0 0
    %172 = vmatpush2.bf16.msra.mxu0 0
    %173 = vmatprep.subr.bf16.mxu0 0
    %174 = vmatpush2.bf16.msra.mxu0 0
    %175 = vmatprep.subr.bf16.mxu0 0
    %176 = vmatpush2.bf16.msra.mxu0 0
    %177 = vmatprep.subr.bf16.mxu0 0
    %178 = vmatpush2.bf16.msra.mxu0 0
    %179 = vmatprep.mubr.bf16.mxu0 0
    %180 = vmatmul.mubr.bf16.gmra.mxu0 %v145
    %v181 = vpop.f32.mrf.mxu0
    %v182 = vadd.f32 %v124, %v181
    %v183 = vpop.f32.mrf.mxu0
    %v184 = vpop.f32.mrf.mxu0
    %v185 = vadd.f32 %v124, %v184
    %v186 = vpop.f32.mrf.mxu0
    %187 = vdwg.mxu0
    %v188 = vpack.c.bf16 %v185, %v182
    %v190 = vunpack.c.l.b16 %v188
    %v191 = vunpack.c.h.b16 %v188
    %v192 = vpack.c.b16 %v190, %v190
    %v193 = vpack.c.b16 %v191, %v191
    %vm196 = vcmask 781312
    %197 = vst.msk [vmem:[#allocation8] sm:$0xf] %vm196, %v192
    %198 = vst.msk [vmem:[#allocation8 + $0x4] sm:$0xf] %vm196, %v193
    // Predicated region
    $region34: #{tpu_custom_call.1} parent=1 // pred_check
      _
    $region35: #{tpu_custom_call.1} parent=1 // pred_check_branch
      %200 = sbr.rel (0) target = $region37
    $region36: #{tpu_custom_call.1} parent=1 // pred_region
      %s202 = ssub.s32 128, 128
      %203 = vsyncadd [#allocation5], %s202
      %s204 = sshll.u32 [#allocation8], 4
      %s205 = int_to_ptr.vmem [resolvable:$true] %s204
      %210 = dma.vmem_to_hbm [thread:$0]  %s205, 128, %s5, [#allocation5], 64, 64, 4
    $region37: #{tpu_custom_call.1} parent=1 // pred_fallthru
      _
    // Predicated region
    $region38: #{tpu_custom_call.1} parent=1 // pred_check
      _
    $region39: #{tpu_custom_call.1} parent=1 // pred_check_branch
      %212 = sbr.rel (0) target = $region41
    $region40: #{tpu_custom_call.1} parent=1 // pred_region
      %213 = dma.done [#allocation5], 128
    $region41: #{tpu_custom_call.1} parent=1 // pred_fallthru
      _
    %214 = vsyncpa [#allocation4], 1
    %215 = vsyncpa [#allocation7], 1
    %216 = vsyncpa [#allocation5], 1

</llo_original>
